<compile_context>
chip_gen: v6e
topology: v6e:2x2x1
jax: 0.10.0
libtpu: 0.0.40
codegen_flags: <defaults>
</compile_context>

<pallas_src>
import functools

import jax
import jax.numpy as jnp
from jax.experimental import pallas as pl
from jax.experimental.pallas import tpu as pltpu


_MIN_GRID_STEPS = 4     # >=4 steps: pipeline overlap + both v7x TensorCores busy
_HEADROOM = 2 << 20     # VMEM slack for compiler-internal scratch / semaphores


def _vmem_budget_bytes():
    """~75% of per-core VMEM: ~48 MiB on v7x (64 MiB), ~96 MiB on v5e/v6e (128 MiB)."""
    try:
        cap = int(pltpu.get_tpu_info().vmem_capacity_bytes)
    except Exception:
        cap = 64 << 20          # conservative (v7x-sized) default if the query fails
    return max(16 << 20, (cap * 3) // 4)


# ---------------------------------------------------------------------------
# Fused path: one read + one write of x, batch-tiled.
# ---------------------------------------------------------------------------

def _se_fused_kernel(x_ref, w1_ref, w2_ref, o_ref):
    # x_ref: (TB, C, HW); w1_ref: (C, Cr) pre-scaled by 1/HW; w2_ref: (Cr, C).
    # Global average pool over the lane dim; f32 accumulation (bf16-safe); the
    # 1/HW mean factor is folded into w1.
    pooled = jnp.sum(x_ref[...].astype(jnp.float32), axis=-1)               # (TB, C)

    # fc1 + ReLU
    h = jnp.dot(pooled, w1_ref[...], preferred_element_type=jnp.float32)    # (TB, Cr)
    h = jnp.maximum(h, 0.0)

    # fc2 + Hsigmoid:  relu6(z + 3) / 6  ==  clip(z/6 + 0.5, 0, 1)
    z = jnp.dot(h, w2_ref[...], preferred_element_type=jnp.float32)         # (TB, C)
    s = jnp.clip(z * (1.0 / 6.0) + 0.5, 0.0, 1.0)

    # Re-read x_ref so the big tile is not kept live across the matmuls
    # (streaming multiply, low vreg/VMEM pressure).
    o_ref[...] = (x_ref[...] * s[:, :, None]).astype(o_ref.dtype)


def _choose_batch_tile(b, c, hw, itemsize, budget, w_bytes):
    """Largest batch tile fitting the VMEM budget, capped so the grid keeps at
    least _MIN_GRID_STEPS steps. Returns 0 if even one batch row is too big."""
    avail = budget - 4 * w_bytes - _HEADROOM      # weights are double-buffered
    per_batch = 4 * c * hw * itemsize             # in + out tile, double-buffered
    if avail < per_batch:
        return 0
    tb = min(b, avail // per_batch)
    tb = min(tb, max(1, -(-b // _MIN_GRID_STEPS)))    # keep >= 4 grid steps
    if tb >= 8:
        tb = (tb // 8) * 8                            # sublane-dense pooled (TB, C)
    return max(int(tb), 1)


def _se_fused(x_flat, w1_t, w2_t, tb, budget):
    b, c, hw = x_flat.shape
    cr = w1_t.shape[1]
    itemsize = jnp.dtype(x_flat.dtype).itemsize
    w_bytes = 4 * (c * cr + cr * c)

    vmem_need = 4 * tb * c * hw * itemsize + 4 * w_bytes + _HEADROOM
    vmem_limit = int(min(budget, max(vmem_need, 8 << 20)))

    cost = pl.CostEstimate(
        flops=int(2 * b * c * hw + 4 * b * c * cr),
        transcendentals=0,
        bytes_accessed=int(2 * b * c * hw * itemsize + 2 * w_bytes),
    )

    return pl.pallas_call(
        _se_fused_kernel,
        out_shape=jax.ShapeDtypeStruct((b, c, hw), x_flat.dtype),
        grid_spec=pltpu.PrefetchScalarGridSpec(
            num_scalar_prefetch=0,
            grid=(pl.cdiv(b, tb),),
            in_specs=[
                # Batch-tiled activations: full C / HW blocks (lane-dense HW;
                # (8,128) rule satisfied via full dims).
                pl.BlockSpec((tb, c, hw), lambda i: (i, 0, 0)),
                # Weights: constant block index -> not re-DMA'd per step; the
                # double-buffer allocation (2x w_bytes) is in the budget above.
                pl.BlockSpec((c, cr), lambda i: (0, 0)),
                pl.BlockSpec((cr, c), lambda i: (0, 0)),
            ],
            out_specs=pl.BlockSpec((tb, c, hw), lambda i: (i, 0, 0)),
        ),
        # Output reuses the input HBM buffer (x is donated at the jit boundary).
        input_output_aliases={0: 0},
        cost_estimate=cost,
        compiler_params=pltpu.CompilerParams(
            dimension_semantics=("parallel",),        # megacore-sharded on v7x
            vmem_limit_bytes=vmem_limit,
        ),
    )(x_flat, w1_t, w2_t)


# ---------------------------------------------------------------------------
# Fallback path: spatial tiling (pool accumulator + separate scale pass).
# ---------------------------------------------------------------------------

def _pool_kernel(x_ref, p_ref, *, hw, thw, need_mask):
    # Accumulate the spatial sum into the output-resident pooled block.
    @pl.when(pl.program_id(1) == 0)
    def _():
        p_ref[...] = jnp.zeros_like(p_ref)

    xt = x_ref[...].astype(jnp.float32)              # (1, C, THW)
    if need_mask:                                    # last spatial block is partial
        col = jax.lax.broadcasted_iota(jnp.int32, xt.shape, dimension=2)
        xt = jnp.where(col + pl.program_id(1) * thw < hw, xt, 0.0)
    p_ref[...] += jnp.sum(xt, axis=-1, keepdims=True)


def _scale_kernel(x_ref, s_ref, o_ref):
    o_ref[...] = (x_ref[...] * s_ref[...]).astype(o_ref.dtype)


def _se_spatial(x_flat, w1_t, w2_t, budget):
    """Used when one batch row does not fit the VMEM budget (or when forced).
    Costs ~1.5x the HBM traffic of the fused path."""
    b, c, hw = x_flat.shape
    itemsize = jnp.dtype(x_flat.dtype).itemsize

    # Spatial tile: lane-aligned multiple of 128 that fits the budget, leaving
    # at least 2 spatial steps so the pipeline overlaps.
    if hw <= 128:
        thw = hw
    else:
        fit = max(128, (budget - _HEADROOM) // (4 * c * itemsize))
        thw = max(128, (min(fit, hw) // 128) * 128)
        if thw >= hw:
            thw = max(128, ((hw - 1) // 128) * 128)
    n_hw = pl.cdiv(hw, thw)
    need_mask = (hw % thw) != 0

    # Pass 1: spatial-sum pooling with an output-resident accumulator.
    pool_need = 2 * c * thw * itemsize + 2 * c * 4 + _HEADROOM
    pooled = pl.pallas_call(
        functools.partial(_pool_kernel, hw=hw, thw=thw, need_mask=need_mask),
        out_shape=jax.ShapeDtypeStruct((b, c, 1), jnp.float32),
        grid_spec=pltpu.PrefetchScalarGridSpec(
            num_scalar_prefetch=0,
            grid=(b, n_hw),
            in_specs=[pl.BlockSpec((1, c, thw), lambda i, j: (i, 0, j))],
            out_specs=pl.BlockSpec((1, c, 1), lambda i, j: (i, 0, 0)),
        ),
        cost_estimate=pl.CostEstimate(
            flops=int(b * c * hw),
            transcendentals=0,
            bytes_accessed=int(b * c * hw * itemsize + b * c * 4),
        ),
        compiler_params=pltpu.CompilerParams(
            dimension_semantics=("parallel", "arbitrary"),   # reduction axis last
            vmem_limit_bytes=int(min(budget, max(pool_need, 8 << 20))),
        ),
    )(x_flat)

    # Tiny FCs on (B, C): plain JAX (negligible vs the HBM-bound passes over x).
    h = jnp.maximum(pooled[..., 0] @ w1_t, 0.0)      # 1/HW already folded into w1_t
    z = h @ w2_t
    s = jnp.clip(z * (1.0 / 6.0) + 0.5, 0.0, 1.0).astype(jnp.float32)[:, :, None]

    # Pass 2: broadcast-multiply the scale over the spatial tiles.
    scale_need = 4 * c * thw * itemsize + 2 * c * 4 + _HEADROOM
    return pl.pallas_call(
        _scale_kernel,
        out_shape=jax.ShapeDtypeStruct((b, c, hw), x_flat.dtype),
        grid_spec=pltpu.PrefetchScalarGridSpec(
            num_scalar_prefetch=0,
            grid=(b, n_hw),
            in_specs=[
                pl.BlockSpec((1, c, thw), lambda i, j: (i, 0, j)),
                pl.BlockSpec((1, c, 1), lambda i, j: (i, 0, 0)),
            ],
            out_specs=pl.BlockSpec((1, c, thw), lambda i, j: (i, 0, j)),
        ),
        input_output_aliases={0: 0},
        cost_estimate=pl.CostEstimate(
            flops=int(b * c * hw),
            transcendentals=0,
            bytes_accessed=int(2 * b * c * hw * itemsize + b * c * 4),
        ),
        compiler_params=pltpu.CompilerParams(
            dimension_semantics=("parallel", "parallel"),
            vmem_limit_bytes=int(min(budget, max(scale_need, 8 << 20))),
        ),
    )(x_flat, s)


# ---------------------------------------------------------------------------
# Public wrapper
# ---------------------------------------------------------------------------

@functools.partial(jax.jit, static_argnames=("force_spatial_tiling",),
                   donate_argnums=(0,))
def se_module(x, w1, w2, force_spatial_tiling=False):
    """x: (B, C, H, W); w1: (C//r, C), w2: (C, C//r)  (torch nn.Linear layouts).
    x is donated (its HBM buffer is reused for the output)."""
    b, c, h, w = x.shape
    hw = h * w
    x_flat = x.reshape(b, c, hw)

    # Torch Linear computes y @ W^T; pre-transpose so the kernel does y @ W,
    # and fold the 1/HW mean into w1 (fc1 has no bias, so this is exact).
    w1_t = w1.astype(jnp.float32).T * (1.0 / hw)     # (C, Cr)
    w2_t = w2.astype(jnp.float32).T                  # (Cr, C)
    cr = w1_t.shape[1]

    itemsize = jnp.dtype(x.dtype).itemsize
    budget = _vmem_budget_bytes()
    w_bytes = 4 * (c * cr + cr * c)
    tb = _choose_batch_tile(b, c, hw, itemsize, budget, w_bytes)

    # TODO(synk): for late-stage SE blocks with small HW (7x7 / 14x14) a
    # channels-last (B, HW, C) layout supplied by the producer would make the
    # lane dim dense; not done here since it would require an extra HBM
    # transpose just for this op.
    if force_spatial_tiling or tb == 0:
        out_flat = _se_spatial(x_flat, w1_t, w2_t, budget)
    else:
        out_flat = _se_fused(x_flat, w1_t, w2_t, tb, budget)
    return out_flat.reshape(b, c, h, w)


def se_module_ref(x, w1, w2):
    """Pure-JAX reference for validation."""
    y = jnp.mean(x, axis=(2, 3))                        # (B, C)
    y = jnp.maximum(y @ w1.T, 0.0)                      # (B, Cr)
    y = y @ w2.T                                        # (B, C)
    y = jnp.clip(y + 3.0, 0.0, 6.0) / 6.0               # Hsigmoid
    return x * y[:, :, None, None]


if __name__ == "__main__":
    key = jax.random.PRNGKey(0)
    B, C, H, W = 2, 8, 16, 16
    reduction = 4
    Cr = C // reduction

    kx, k1, k2 = jax.random.split(key, 3)
    # torch nn.Linear weight layouts: fc1 (Cr, C), fc2 (C, Cr)
    w1 = jax.random.normal(k1, (Cr, C), dtype=jnp.float32) * 0.5
    w2 = jax.random.normal(k2, (C, Cr), dtype=jnp.float32) * 0.5

    def fresh_x(dtype=jnp.float32):
        # x is donated to the kernel, so materialize a fresh deterministic copy
        # for every call.
        return jax.random.normal(kx, (B, C, H, W), dtype=jnp.float32).astype(dtype)

    ref = jax.block_until_ready(se_module_ref(fresh_x(), w1, w2))

    # Fused (default) path.
    out = jax.block_until_ready(se_module(fresh_x(), w1, w2))
    assert out.shape == (B, C, H, W) and out.dtype == jnp.float32
    assert jnp.allclose(out, ref, atol=2e-5, rtol=2e-5), "fused path mismatch"

    # Spatial-tiled fallback path (forced here; normally used only when one
    # batch row does not fit the VMEM budget).
    out_fb = jax.block_until_ready(
        se_module(fresh_x(), w1, w2, force_spatial_tiling=True))
    assert jnp.allclose(out_fb, ref, atol=2e-5, rtol=2e-5), "fallback path mismatch"

    # bf16 activation path (f32 pooling / FC accumulation inside the kernel).
    out_bf16 = jax.block_until_ready(se_module(fresh_x(jnp.bfloat16), w1, w2))
    assert out_bf16.dtype == jnp.bfloat16
    assert jnp.allclose(out_bf16.astype(jnp.float32), ref, atol=1e-1, rtol=1e-1), \
        "bf16 path mismatch"

    print("KERNEL_OK")
</pallas_src>

<mosaic_0001>
module attributes {stable_mosaic.version = 11 : i64} {
  func.func @_se_fused_kernel(%arg0: i32, %arg1: memref<1x8x256xf32, #tpu.memory_space<vmem>>, %arg2: memref<8x2xf32, #tpu.memory_space<vmem>>, %arg3: memref<2x8xf32, #tpu.memory_space<vmem>>, %arg4: memref<1x8x256xf32, #tpu.memory_space<vmem>>) attributes {dimension_semantics = [#tpu.dimension_semantics<parallel>], iteration_bounds = array<i64: 2>, scalar_prefetch = 0 : i64, scratch_operands = 0 : i64, tpu.core_type = #tpu.core_type<tc>, window_params = [{transform_indices = @transform_0, window_bounds = array<i64: 1, 8, 256>}, {pipeline_mode = #tpu.pipeline_mode<synchronous>, transform_indices = @transform_1, window_bounds = array<i64: 8, 2>}, {pipeline_mode = #tpu.pipeline_mode<synchronous>, transform_indices = @transform_2, window_bounds = array<i64: 2, 8>}, {transform_indices = @transform_3, window_bounds = array<i64: 1, 8, 256>}]} {
    %c0 = arith.constant 0 : index
    %c0_0 = arith.constant 0 : index
    %c0_1 = arith.constant 0 : index
    %0 = vector.load %arg1[%c0, %c0_0, %c0_1] : memref<1x8x256xf32, #tpu.memory_space<vmem>>, vector<1x8x256xf32>
    %cst = arith.constant dense<0.000000e+00> : vector<1x8xf32>
    %1 = vector.multi_reduction <add>, %0, %cst [2] : vector<1x8x256xf32> to vector<1x8xf32>
    %c0_2 = arith.constant 0 : index
    %c0_3 = arith.constant 0 : index
    %2 = vector.load %arg2[%c0_2, %c0_3] : memref<8x2xf32, #tpu.memory_space<vmem>>, vector<8x2xf32>
    %cst_4 = arith.constant dense<0.000000e+00> : vector<1x2xf32>
    %3 = tpu.matmul %1, %2, %cst_4 {dimension_numbers = #tpu.dot_dimension_numbers<[1], [0], [0], [1], [0, 0, 1, 1], [], []>} : vector<1x8xf32>, vector<8x2xf32>, vector<1x2xf32> -> vector<1x2xf32>
    %cst_5 = arith.constant 0.000000e+00 : f32
    %4 = vector.broadcast %cst_5 : f32 to vector<1x2xf32>
    %5 = arith.maximumf %3, %4 : vector<1x2xf32>
    %c0_6 = arith.constant 0 : index
    %c0_7 = arith.constant 0 : index
    %6 = vector.load %arg3[%c0_6, %c0_7] : memref<2x8xf32, #tpu.memory_space<vmem>>, vector<2x8xf32>
    %cst_8 = arith.constant dense<0.000000e+00> : vector<1x8xf32>
    %7 = tpu.matmul %5, %6, %cst_8 {dimension_numbers = #tpu.dot_dimension_numbers<[1], [0], [0], [1], [0, 0, 1, 1], [], []>} : vector<1x2xf32>, vector<2x8xf32>, vector<1x8xf32> -> vector<1x8xf32>
    %cst_9 = arith.constant 0.166666672 : f32
    %8 = vector.broadcast %cst_9 : f32 to vector<1x8xf32>
    %9 = arith.mulf %7, %8 : vector<1x8xf32>
    %cst_10 = arith.constant 5.000000e-01 : f32
    %10 = vector.broadcast %cst_10 : f32 to vector<1x8xf32>
    %11 = arith.addf %9, %10 : vector<1x8xf32>
    %cst_11 = arith.constant 0.000000e+00 : f32
    %cst_12 = arith.constant 1.000000e+00 : f32
    %12 = vector.broadcast %cst_11 : f32 to vector<1x8xf32>
    %13 = arith.maximumf %12, %11 : vector<1x8xf32>
    %14 = vector.broadcast %cst_12 : f32 to vector<1x8xf32>
    %15 = arith.minimumf %14, %13 : vector<1x8xf32>
    %c0_13 = arith.constant 0 : index
    %c0_14 = arith.constant 0 : index
    %c0_15 = arith.constant 0 : index
    %16 = vector.load %arg1[%c0_13, %c0_14, %c0_15] : memref<1x8x256xf32, #tpu.memory_space<vmem>>, vector<1x8x256xf32>
    %17 = vector.shape_cast %15 : vector<1x8xf32> to vector<1x8x1xf32>
    %18 = vector.broadcast %17 : vector<1x8x1xf32> to vector<1x8x256xf32>
    %19 = arith.mulf %16, %18 : vector<1x8x256xf32>
    %c0_16 = arith.constant 0 : index
    %c0_17 = arith.constant 0 : index
    %c0_18 = arith.constant 0 : index
    %20 = vector.load %arg4[%c0_16, %c0_17, %c0_18] : memref<1x8x256xf32, #tpu.memory_space<vmem>>, vector<1x8x256xf32>
    tpu.vector_store %arg4[%c0_16, %c0_17, %c0_18], %19 {strides = array<i32>} : memref<1x8x256xf32, #tpu.memory_space<vmem>>, vector<1x8x256xf32>,
    return
  }
  func.func @transform_0(%arg0: i32) -> (i32, i32, i32) {
    %c0_i32 = arith.constant 0 : i32
    %c0_i32_0 = arith.constant 0 : i32
    %c0_i32_1 = arith.constant 0 : i32
    return %arg0, %c0_i32, %c0_i32_0 : i32, i32, i32
  }
  func.func @transform_1(%arg0: i32) -> (i32, i32) {
    %c0_i32 = arith.constant 0 : i32
    %c0_i32_0 = arith.constant 0 : i32
    %c0_i32_1 = arith.constant 0 : i32
    return %c0_i32, %c0_i32_0 : i32, i32
  }
  func.func @transform_2(%arg0: i32) -> (i32, i32) {
    %c0_i32 = arith.constant 0 : i32
    %c0_i32_0 = arith.constant 0 : i32
    %c0_i32_1 = arith.constant 0 : i32
    return %c0_i32, %c0_i32_0 : i32, i32
  }
  func.func @transform_3(%arg0: i32) -> (i32, i32, i32) {
    %c0_i32 = arith.constant 0 : i32
    %c0_i32_0 = arith.constant 0 : i32
    %c0_i32_1 = arith.constant 0 : i32
    return %arg0, %c0_i32, %c0_i32_0 : i32, i32, i32
  }
}

</mosaic_0001>

<llo_original>
// kernel: se_module.1
$region0: #{se_module.1}
  #allocation0 [shape = 'u32[]', space=smem, size = 0x4, offset = 0x4, fixed_abs, tag = 'smem constant byte address 0x4 - core index']
  #allocation1 [shape = 'u32[144,128]{1,0:T(1,128)}', space=vmem, size = 0x12000, scoped, tag = 'internal scratch']
  %s0 = inlined_call_operand.vmem [shape: f32[2,8,256], index: 0, kind: input, shape index: {}, may-alias: {0,3}]
  %s1 = inlined_call_operand.vmem [shape: f32[8,2], index: 1, kind: input, shape index: {}]
  %s2 = inlined_call_operand.vmem [shape: f32[2,8], index: 2, kind: input, shape index: {}]
  %s3 = inlined_call_operand.vmem [shape: f32[2,8,256], index: 3, kind: output, shape index: {}, may-alias: {0,3}]
  %s4 = sld [smem:[#allocation0]]
  $region45: #{se_module.1} parent=0
    _
  %s6 = ssub.s32 1, %s4
  %s7 = scalar_select 0, %s6, %s4
  loop: start=0, step=1, limit=4
  $region2: #{se_module.1} parent=0 // loop_pre_header
    _
  $region3: #{se_module.1} parent=0 // loop_header
    %s9 = sphi 0, %s13
    %p10 = scmp.ge.s32.totalorder %s9, 4
    %s19 = sphi 0, %s21
    %s22 = sphi 0, %s19
    %s23 = sphi 0, %s22
    %s39 = sphi 0, %s23
    %s43 = sphi 0, %s43
    %s45 = sphi 0, %s43
    %s46 = sphi 0, %s45
    %s60 = sphi 0, %s46
    %s64 = sphi 0, %s64
    %s66 = sphi 0, %s64
    %s67 = sphi 0, %s66
    %s81 = sphi 0, %s67
    %s87 = sphi 0, %s89
    %s90 = sphi 0, %s87
    %s91 = sphi 0, %s90
    %s107 = sphi 0, %s91
  $region4: #{se_module.1} parent=0 // loop_header_branch
    %12 = sbr.rel (%p10) target = $region8
  $region5: #{se_module.1} parent=0 // loop_body
    %s14 = ssub.s32 %s9, 1
    %s15 = ssub.s32 %s9, 2
    %s16 = sadd.s32 %s9, 1
    %s17 = ssub.s32 %s9, %s16
    %p18 = scmp.eq.s32.totalorder %s17, 0
    %s20 = sadd.s32 %s19, 1
    %s21 = scalar_select %p18, %s19, %s20
    %p24 = pneg %p18
    %p25 = scmp.eq.s32.totalorder %s9, 1
    %p26 = por %p24, %p25
    %p27 = scmp.ne.s32.totalorder %s19, %s22
    %p28 = scmp.eq.s32.totalorder %s9, 0
    %p29 = por %p27, %p28
    %p30 = scmp.ne.s32.totalorder %s19, %s22
    %p31 = scmp.eq.s32.totalorder %s14, 1
    %p32 = por %p30, %p31
    %p33 = scmp.ne.s32.totalorder %s22, %s23
    %p34 = scmp.eq.s32.totalorder %s14, 0
    %p35 = por %p33, %p34
    %p36 = scmp.ne.s32.totalorder %s22, %s23
    %p37 = scmp.eq.s32.totalorder %s15, 1
    %p38 = por %p36, %p37
    %p40 = scmp.ne.s32.totalorder %s23, %s39
    %p41 = scmp.eq.s32.totalorder %s15, 0
    %p42 = por %p40, %p41
    %s44 = sadd.s32 %s43, 1
    %p47 = scmp.eq.s32.totalorder %s9, 1
    %p48 = scmp.ne.s32.totalorder %s43, %s45
    %p49 = scmp.eq.s32.totalorder %s9, 0
    %p50 = por %p48, %p49
    %p51 = scmp.ne.s32.totalorder %s43, %s45
    %p52 = scmp.eq.s32.totalorder %s14, 1
    %p53 = por %p51, %p52
    %p54 = scmp.ne.s32.totalorder %s45, %s46
    %p55 = scmp.eq.s32.totalorder %s14, 0
    %p56 = por %p54, %p55
    %p57 = scmp.ne.s32.totalorder %s45, %s46
    %p58 = scmp.eq.s32.totalorder %s15, 1
    %p59 = por %p57, %p58
    %p61 = scmp.ne.s32.totalorder %s46, %s60
    %p62 = scmp.eq.s32.totalorder %s15, 0
    %p63 = por %p61, %p62
    %s65 = sadd.s32 %s64, 1
    %p68 = scmp.eq.s32.totalorder %s9, 1
    %p69 = scmp.ne.s32.totalorder %s64, %s66
    %p70 = scmp.eq.s32.totalorder %s9, 0
    %p71 = por %p69, %p70
    %p72 = scmp.ne.s32.totalorder %s64, %s66
    %p73 = scmp.eq.s32.totalorder %s14, 1
    %p74 = por %p72, %p73
    %p75 = scmp.ne.s32.totalorder %s66, %s67
    %p76 = scmp.eq.s32.totalorder %s14, 0
    %p77 = por %p75, %p76
    %p78 = scmp.ne.s32.totalorder %s66, %s67
    %p79 = scmp.eq.s32.totalorder %s15, 1
    %p80 = por %p78, %p79
    %p82 = scmp.ne.s32.totalorder %s67, %s81
    %p83 = scmp.eq.s32.totalorder %s15, 0
    %p84 = por %p82, %p83
    %s85 = ssub.s32 %s9, %s16
    %p86 = scmp.eq.s32.totalorder %s85, 0
    %s88 = sadd.s32 %s87, 1
    %s89 = scalar_select %p86, %s87, %s88
    %p92 = pneg %p86
    %p93 = scmp.eq.s32.totalorder %s9, 1
    %p94 = por %p92, %p93
    %p95 = scmp.ne.s32.totalorder %s87, %s90
    %p96 = scmp.eq.s32.totalorder %s9, 0
    %p97 = por %p95, %p96
    %p98 = scmp.ne.s32.totalorder %s87, %s90
    %p99 = scmp.eq.s32.totalorder %s14, 1
    %p100 = por %p98, %p99
    %p101 = scmp.ne.s32.totalorder %s90, %s91
    %p102 = scmp.eq.s32.totalorder %s14, 0
    %p103 = por %p101, %p102
    %p104 = scmp.ne.s32.totalorder %s90, %s91
    %p105 = scmp.eq.s32.totalorder %s15, 1
    %p106 = por %p104, %p105
    %p108 = scmp.ne.s32.totalorder %s91, %s107
    %p109 = scmp.eq.s32.totalorder %s15, 0
    %p110 = por %p108, %p109
    %p111 = scmp.le.s32.totalorder 1, %s9
    %p112 = scmp.lt.s32.totalorder %s9, 3
    %p113 = pnand %p111, %p112
    %p114 = pneg %p113
    // Predicated region
    $region9: #{se_module.1} parent=5 // pred_check
      _
    $region10: #{se_module.1} parent=5 // pred_check_branch
      %116 = sbr.rel (%p113) target = $region12
    $region11: #{se_module.1} parent=5 // pred_region
      %s117 = ssub.s32 %s9, 1
      // Predicated region
      $region13: #{se_module.1} parent=11 // pred_check
        %p118 = pneg %p56
      $region14: #{se_module.1} parent=11 // pred_check_branch
        %120 = sbr.rel (%p118) target = $region16
      $region15: #{se_module.1} parent=11 // pred_region
        _
      $region16: #{se_module.1} parent=11 // pred_fallthru
        _
      // Predicated region
      $region17: #{se_module.1} parent=11 // pred_check
        %p121 = pneg %p77
      $region18: #{se_module.1} parent=11 // pred_check_branch
        %123 = sbr.rel (%p121) target = $region20
      $region19: #{se_module.1} parent=11 // pred_region
        _
      $region20: #{se_module.1} parent=11 // pred_fallthru
        _
    $region12: #{se_module.1} parent=5 // pred_fallthru
      _
    %p124 = scmp.lt.s32.totalorder %s9, 2
    // Predicated region
    $region21: #{se_module.1} parent=5 // pred_check
      %p125 = pneg %p124
    $region22: #{se_module.1} parent=5 // pred_check_branch
      %127 = sbr.rel (%p125) target = $region24
    $region23: #{se_module.1} parent=5 // pred_region
      // Predicated region
      $region25: #{se_module.1} parent=23 // pred_check
        %p128 = pneg %p29
      $region26: #{se_module.1} parent=23 // pred_check_branch
        %130 = sbr.rel (%p128) target = $region28
      $region27: #{se_module.1} parent=23 // pred_region
        %p131 = scmp.lt.s32.totalorder %s9, 1
        %s132 = scalar_select %p131, %s9, 1
        %s133 = smul.addr %s132, 2
        %s134 = smul.addr %s133, 8
        %s135 = scalar_lea.vmem %s0, %s134
      $region28: #{se_module.1} parent=23 // pred_fallthru
        _
    $region24: #{se_module.1} parent=5 // pred_fallthru
      _
    %p136 = scmp.le.s32.totalorder 1, %s9
    %p137 = scmp.lt.s32.totalorder %s9, 3
    %p138 = pnand %p136, %p137
    %p139 = pneg %p138
    // Predicated region
    $region29: #{se_module.1} parent=5 // pred_check
      _
    $region30: #{se_module.1} parent=5 // pred_check_branch
      %141 = sbr.rel (%p138) target = $region32
    $region31: #{se_module.1} parent=5 // pred_region
      %s142 = ssub.s32 %s9, 1
      %p143 = scmp.lt.s32.totalorder %s14, 1
      %s144 = scalar_select %p143, %s14, 1
      %s145 = smul.addr %s144, 2
      %s146 = smul.addr %s145, 8
      %s147 = scalar_lea.vmem %s0, %s146
      %p148 = pneg %p35
      %p149 = pneg %p32
      %p150 = pneg %p56
      %p151 = pneg %p53
      %p152 = pneg %p77
      %p153 = pneg %p74
      %p154 = pneg %p103
      %p155 = pneg %p100
      %p156 = scmp.lt.s32.totalorder %s14, 1
      %s157 = scalar_select %p156, %s14, 1
      %s158 = smul.addr %s157, 2
      %s159 = smul.addr %s158, 8
      %s160 = scalar_lea.vmem %s3, %s159
      %p161 = scmp.lt.s32.totalorder %s14, 1
      %s162 = scalar_select %p161, %s14, 1
      %s163 = smul.addr %s162, 2
      %s164 = smul.addr %s163, 8
      %s165 = scalar_lea.vmem %s0, %s164
      %p166 = scmp.lt.s32.totalorder %s14, 1
      %s167 = scalar_select %p166, %s14, 1
      %s168 = smul.addr %s167, 2
      %s169 = smul.addr %s168, 8
      %s170 = scalar_lea.vmem %s3, %s169
      %v171 = vld [vmem:[%s165] sm:$0xff]
      %v172 = vld [vmem:[%s165 + $0x8] sm:$0xff]
      %v173 = vadd.f32 %v171, %v172
      %174 = vadd.xlane.f32.xlu0 %v173
      %v175 = vpop.xlane.xlu0 %174
      %v176 = vld [vmem:[%s1] sm:$0xff]
      %v178 = vlaneseq
      %v179 = vand.u32 %v178, 127
      %v180 = vlaneseq
      %v181 = vshrl.u32 %v180, 7
      %v182 = vsub.s32 %v179, %v181
      %v183 = vrot.slane %v175, %v182
      %vm184 = vcmask 64512
      %v185 = vsel %vm184, %v183, 0
      %187 = vmatprep.subr.mxu0 0.0
      %188 = vmatpush1.msra.mxu0 0.0
      %189 = vmatprep.subr.mxu0 0.0
      %190 = vmatpush1.msra.mxu0 0.0
      %191 = vmatprep.subr.mxu0 0.0
      %192 = vmatpush1.msra.mxu0 0.0
      %193 = vmatprep.subr.mxu0 0.0
      %194 = vmatpush1.msra.mxu0 0.0
      %195 = vmatprep.subr.mxu0 0.0
      %196 = vmatpush1.msra.mxu0 0.0
      %197 = vmatprep.subr.mxu0 0.0
      %198 = vmatpush1.msra.mxu0 0.0
      %199 = vmatprep.subr.mxu0 0.0
      %200 = vmatpush1.msra.mxu0 0.0
      %201 = vmatprep.subr.mxu0 0.0
      %202 = vmatpush1.msra.mxu0 0.0
      %203 = vmatprep.subr.mxu0 0.0
      %204 = vmatpush1.msra.mxu0 0.0
      %205 = vmatprep.subr.mxu0 0.0
      %206 = vmatpush1.msra.mxu0 0.0
      %207 = vmatprep.subr.mxu0 0.0
      %208 = vmatpush1.msra.mxu0 0.0
      %209 = vmatprep.subr.mxu0 0.0
      %210 = vmatpush1.msra.mxu0 0.0
      %211 = vmatprep.subr.mxu0 0.0
      %212 = vmatpush1.msra.mxu0 0.0
      %213 = vmatprep.subr.mxu0 0.0
      %214 = vmatpush1.msra.mxu0 0.0
      %215 = vmatprep.subr.mxu0 0.0
      %216 = vmatpush1.msra.mxu0 0.0
      %217 = vmatprep.subr.mxu0 0.0
      %218 = vmatpush1.msra.mxu0 %v176
      %219 = vmatprep.subr.mxu0 0.0
      %220 = vmatpush2.msra.mxu0 0.0
      %221 = vmatprep.subr.mxu0 0.0
      %222 = vmatpush2.msra.mxu0 0.0
      %223 = vmatprep.subr.mxu0 0.0
      %224 = vmatpush2.msra.mxu0 0.0
      %225 = vmatprep.subr.mxu0 0.0
      %226 = vmatpush2.msra.mxu0 0.0
      %227 = vmatprep.subr.mxu0 0.0
      %228 = vmatpush2.msra.mxu0 0.0
      %229 = vmatprep.subr.mxu0 0.0
      %230 = vmatpush2.msra.mxu0 0.0
      %231 = vmatprep.subr.mxu0 0.0
      %232 = vmatpush2.msra.mxu0 0.0
      %233 = vmatprep.subr.mxu0 0.0
      %234 = vmatpush2.msra.mxu0 0.0
      %235 = vmatprep.subr.mxu0 0.0
      %236 = vmatpush2.msra.mxu0 0.0
      %237 = vmatprep.subr.mxu0 0.0
      %238 = vmatpush2.msra.mxu0 0.0
      %239 = vmatprep.subr.mxu0 0.0
      %240 = vmatpush2.msra.mxu0 0.0
      %241 = vmatprep.subr.mxu0 0.0
      %242 = vmatpush2.msra.mxu0 0.0
      %243 = vmatprep.subr.mxu0 0.0
      %244 = vmatpush2.msra.mxu0 0.0
      %245 = vmatprep.subr.mxu0 0.0
      %246 = vmatpush2.msra.mxu0 0.0
      %247 = vmatprep.subr.mxu0 0.0
      %248 = vmatpush2.msra.mxu0 0.0
      %249 = vmatprep.subr.mxu0 0.0
      %250 = vmatpush2.msra.mxu0 0.0
      %251 = vmatprep.mubr.f32.mxu0 0.0
      %252 = vmatmul.mubr.f32.gmra.mxu0 %v185
      %v253 = vpop.f32.mrf.mxu0
      %v254 = vadd.f32 0.0, %v253
      %v255 = vpop.f32.mrf.mxu0
      %256 = vdwg.mxu0
      %v257 = vmax.f32 %v254, 0.0
      %v258 = vld [vmem:[%s2] sm:$0x3]
      %vm259 = vcmask 15360
      %v261 = vsel %vm259, %v257, 0
      %vm263 = vcmask 1041408
      %v265 = vsel %vm263, %v258, 0
      %267 = vmatprep.subr.mxu0 0.0
      %268 = vmatpush1.msra.mxu0 0.0
      %269 = vmatprep.subr.mxu0 0.0
      %270 = vmatpush1.msra.mxu0 0.0
      %271 = vmatprep.subr.mxu0 0.0
      %272 = vmatpush1.msra.mxu0 0.0
      %273 = vmatprep.subr.mxu0 0.0
      %274 = vmatpush1.msra.mxu0 0.0
      %275 = vmatprep.subr.mxu0 0.0
      %276 = vmatpush1.msra.mxu0 0.0
      %277 = vmatprep.subr.mxu0 0.0
      %278 = vmatpush1.msra.mxu0 0.0
      %279 = vmatprep.subr.mxu0 0.0
      %280 = vmatpush1.msra.mxu0 0.0
      %281 = vmatprep.subr.mxu0 0.0
      %282 = vmatpush1.msra.mxu0 0.0
      %283 = vmatprep.subr.mxu0 0.0
      %284 = vmatpush1.msra.mxu0 0.0
      %285 = vmatprep.subr.mxu0 0.0
      %286 = vmatpush1.msra.mxu0 0.0
      %287 = vmatprep.subr.mxu0 0.0
      %288 = vmatpush1.msra.mxu0 0.0
      %289 = vmatprep.subr.mxu0 0.0
      %290 = vmatpush1.msra.mxu0 0.0
      %291 = vmatprep.subr.mxu0 0.0
      %292 = vmatpush1.msra.mxu0 0.0
      %293 = vmatprep.subr.mxu0 0.0
      %294 = vmatpush1.msra.mxu0 0.0
      %295 = vmatprep.subr.mxu0 0.0
      %296 = vmatpush1.msra.mxu0 0.0
      %297 = vmatprep.subr.mxu0 0.0
      %298 = vmatpush1.msra.mxu0 %v265
      %299 = vmatprep.subr.mxu0 0.0
      %300 = vmatpush2.msra.mxu0 0.0
      %301 = vmatprep.subr.mxu0 0.0
      %302 = vmatpush2.msra.mxu0 0.0
      %303 = vmatprep.subr.mxu0 0.0
      %304 = vmatpush2.msra.mxu0 0.0
      %305 = vmatprep.subr.mxu0 0.0
      %306 = vmatpush2.msra.mxu0 0.0
      %307 = vmatprep.subr.mxu0 0.0
      %308 = vmatpush2.msra.mxu0 0.0
      %309 = vmatprep.subr.mxu0 0.0
      %310 = vmatpush2.msra.mxu0 0.0
      %311 = vmatprep.subr.mxu0 0.0
      %312 = vmatpush2.msra.mxu0 0.0
      %313 = vmatprep.subr.mxu0 0.0
      %314 = vmatpush2.msra.mxu0 0.0
      %315 = vmatprep.subr.mxu0 0.0
      %316 = vmatpush2.msra.mxu0 0.0
      %317 = vmatprep.subr.mxu0 0.0
      %318 = vmatpush2.msra.mxu0 0.0
      %319 = vmatprep.subr.mxu0 0.0
      %320 = vmatpush2.msra.mxu0 0.0
      %321 = vmatprep.subr.mxu0 0.0
      %322 = vmatpush2.msra.mxu0 0.0
      %323 = vmatprep.subr.mxu0 0.0
      %324 = vmatpush2.msra.mxu0 0.0
      %325 = vmatprep.subr.mxu0 0.0
      %326 = vmatpush2.msra.mxu0 0.0
      %327 = vmatprep.subr.mxu0 0.0
      %328 = vmatpush2.msra.mxu0 0.0
      %329 = vmatprep.subr.mxu0 0.0
      %330 = vmatpush2.msra.mxu0 0.0
      %331 = vmatprep.mubr.f32.mxu0 0.0
      %332 = vmatmul.mubr.f32.gmra.mxu0 %v261
      %v333 = vpop.f32.mrf.mxu0
      %v334 = vadd.f32 0.0, %v333
      %v335 = vpop.f32.mrf.mxu0
      %336 = vdwg.mxu0
      %v337 = vmul.f32 %v334, 0.16666667
      %v338 = vadd.f32 %v337, 0.5
      %v339 = vmax.f32 %v338, 0.0
      %v340 = vmin.f32 %v339, 1.0
      %v341 = vlaneseq
      %v342 = vshrl.u32 %v341, 7
      %v343 = vsub.s32 0, %v342
      %v344 = vrot.slane %v340, %v343
      %346 = vbcast.lane.b32.xlu0 %v344, 256
      %v347 = vpop.permute.xlu0 %346
      %v348 = vmul.f32 %v171, %v347
      %v349 = vmul.f32 %v172, %v347
      %350 = vst [vmem:[%s170] sm:$0xff] %v348
      %351 = vst [vmem:[%s170 + $0x8] sm:$0xff] %v349
      %p352 = scmp.lt.s32.totalorder %s14, 1
      %s353 = scalar_select %p352, %s14, 1
      %s354 = smul.addr %s353, 2
      %s355 = smul.addr %s354, 8
      %s356 = scalar_lea.vmem %s3, %s355
      // Predicated region
      $region33: #{se_module.1} parent=31 // pred_check
        %p357 = pneg %p100
      $region34: #{se_module.1} parent=31 // pred_check_branch
        %359 = sbr.rel (%p357) target = $region36
      $region35: #{se_module.1} parent=31 // pred_region
        _
      $region36: #{se_module.1} parent=31 // pred_fallthru
        _
    $region32: #{se_module.1} parent=5 // pred_fallthru
      _
    %p360 = scmp.le.s32.totalorder 2, %s9
    // Predicated region
    $region37: #{se_module.1} parent=5 // pred_check
      %p361 = pneg %p360
    $region38: #{se_module.1} parent=5 // pred_check_branch
      %363 = sbr.rel (%p361) target = $region40
    $region39: #{se_module.1} parent=5 // pred_region
      %s364 = ssub.s32 %s9, 2
      // Predicated region
      $region41: #{se_module.1} parent=39 // pred_check
        %p365 = pneg %p106
      $region42: #{se_module.1} parent=39 // pred_check_branch
        %367 = sbr.rel (%p365) target = $region44
      $region43: #{se_module.1} parent=39 // pred_region
        %p368 = scmp.lt.s32.totalorder %s15, 1
        %s369 = scalar_select %p368, %s15, 1
        %s370 = smul.addr %s369, 2
        %s371 = smul.addr %s370, 8
        %s372 = scalar_lea.vmem %s3, %s371
      $region44: #{se_module.1} parent=39 // pred_fallthru
        _
    $region40: #{se_module.1} parent=5 // pred_fallthru
      _
  $region6: #{se_module.1} parent=0 // loop_footer
    %s13 = sadd.s32 1, %s9
  $region7: #{se_module.1} parent=0 // loop_footer_branch
    %8 = sbr.rel target = $region3
  $region8: #{se_module.1} parent=0 // loop_exit
    _

</llo_original>
